<compile_context>
chip_gen: v7x
topology: tpu7x:2x2x1
jax: 0.10.0
libtpu: 0.0.40
codegen_flags: <defaults>
</compile_context>

<pallas_src>
import functools

import jax
import jax.numpy as jnp
from jax.experimental import pallas as pl
from jax.experimental.pallas import tpu as pltpu


def mhgat_kernel(h_ref, adj_ref, wext_ref, cdst_ref, w0_ref, o_ref, *, n_heads):
    N, D = h_ref.shape          # (nodes, per-head feature dim)
    H = n_heads
    HD = H * D

    h = h_ref[...]              # (N, D)
    adj = adj_ref[...]          # (N, N) 0/1 float
    neg = jnp.float32(-1e30)

    # --- MXU push 1: all-head projection with the source attention vectors
    # folded in (wrapper appends C_src columns to W_all), so the per-head
    # "a_src . wh_i" logits fall out of the same lane-dense matmul for free.
    proj = jnp.dot(h, wext_ref[...], preferred_element_type=jnp.float32)  # (N, H*D + H)
    wh_all = proj[:, :HD]            # (N, H*D)  all heads, lane-dense
    s_src = proj[:, HD:HD + H]       # (N, H)    s_src[i, h] = a_src_h . wh_i

    # --- MXU push 2: destination logits directly in row layout (H, N), so no
    # (N,1)->(1,N) transposes are needed anywhere (replaces the 2*H per-head
    # einsums of the previous version with a single contraction).
    s_dst_t = jnp.einsum('hd,nd->hn', cdst_ref[...], h,
                         preferred_element_type=jnp.float32)              # (H, N)

    # --- Stack all heads on the sublane axis: (H*N, N). Building the stacked
    # logits is H cheap broadcast-adds + one concat (VPU/XLU work hiding under
    # MXU slack); the masked softmax then runs as ONE vectorized chain instead
    # of H unrolled copies.
    score_blocks = [s_src[:, hd:hd + 1] + s_dst_t[hd:hd + 1, :] for hd in range(H)]
    scores = jnp.concatenate(score_blocks, axis=0)                        # (H*N, N)
    # leaky_relu with PyTorch's default negative_slope = 0.01
    scores = jnp.where(scores >= 0, scores, 0.01 * scores)

    adj_stk = jnp.concatenate([adj] * H, axis=0)                          # (H*N, N)
    sm = jnp.where(adj_stk > 0.0, scores, neg)
    sm = sm - jnp.max(sm, axis=-1, keepdims=True)
    # exp of masked entries (~ -1e30 after the max shift) underflows to exactly
    # 0, so no re-mask select is needed (each node has >= 1 neighbor here —
    # guaranteed by the self-loops, matching the PyTorch module's assumption).
    e = jnp.exp(sm)
    denom = jnp.maximum(jnp.sum(e, axis=-1, keepdims=True), jnp.float32(1e-30))
    alpha = e / denom               # exact divide for parity with PyTorch      (H*N, N)

    # --- MXU push 3: one (H*N, N) @ (N, H*D) matmul replaces the H per-head
    # alpha_h @ wh_h pushes + the lane concat; the per-head outputs are the
    # diagonal (N, D) blocks of the result (off-diagonal blocks are wasted
    # FLOPs but free at this size — one MXU fill/drain instead of four, and no
    # risky cross-tile reshape is required to feed it).
    out_big = jnp.dot(alpha, wh_all, preferred_element_type=jnp.float32)  # (H*N, H*D)
    heads = jnp.concatenate(
        [out_big[hd * N:(hd + 1) * N, hd * D:(hd + 1) * D] for hd in range(H)],
        axis=1)                                                           # (N, H*D)
    heads = jnp.maximum(heads, 0.0)                                       # per-head relu

    # --- MXU push 4: final W0 projection, K = H*D = 128 lane-dense.
    o_ref[...] = jnp.dot(heads, w0_ref[...], preferred_element_type=jnp.float32)


def prepare_gat_params(W_heads, a_heads, w0):
    """One-time layout plumbing (hoist out of any step loop / jit-constant):
      W_ext  (D, H*D + H): [W_all | C_src], W_all[:, h*D:(h+1)*D] = W_h.T and
                           C_src[:, h] = W_h.T @ a_src_h  (folded src logits)
      C_dstT (H, D):       C_dstT[h] = W_h.T @ a_dst_h    (dst logits, row layout)
      W0_all (H*D, D):     w0.T
    """
    H, Dout, D = W_heads.shape
    W_all = jnp.transpose(W_heads, (2, 0, 1)).reshape(D, H * Dout)        # (D, H*D)
    a_src = a_heads[:, :D]                                                # (H, D)
    a_dst = a_heads[:, D:]                                                # (H, D)
    C_src = jnp.einsum('hod,ho->dh', W_heads, a_src)                      # (D, H)
    C_dstT = jnp.einsum('hod,ho->hd', W_heads, a_dst)                     # (H, D)
    W_ext = jnp.concatenate([W_all, C_src], axis=1)                       # (D, H*D + H)
    W0_all = jnp.transpose(w0)                                            # (H*D, D)
    return W_ext, C_dstT, W0_all


def multihead_gat(h, adj, n_list, W_ext, C_dstT, W0_all, *, n_heads):
    """h: (N, D), adj: (N, N) 0/1 float, n_list unused (== adj.sum(1)),
    remaining args are the prepared parameters from prepare_gat_params."""
    del n_list  # redundant with adj
    N, D = h.shape

    vmem = pl.BlockSpec(memory_space=pltpu.MemorySpace.VMEM)
    # TODO(synk): if N is scaled up (>= ~1K nodes) add a row-tiled "parallel"
    # grid axis over query blocks (softmax is row-independent), store adj as
    # int8/bf16, cast MXU operands to bf16 (keep the softmax chain f32), and
    # set pltpu.CompilerParams(vmem_limit_bytes=...) sized for v7x's 64 MiB.
    # TODO(synk): if called per-graph in a batch, add a leading "parallel"
    # grid axis over graphs instead of B separate invocations (amortizes the
    # fixed per-call overhead and uses both v7x TensorCores).
    return pl.pallas_call(
        functools.partial(mhgat_kernel, n_heads=n_heads),
        out_shape=jax.ShapeDtypeStruct((N, D), jnp.float32),
        in_specs=[vmem, vmem, vmem, vmem, vmem],
        out_specs=vmem,
    )(h, adj, W_ext, C_dstT, W0_all)


def multihead_gat_reference(h, adj, W_heads, a_heads, w0):
    """Pure-JAX reference of the same math (for verification)."""
    N, D = h.shape
    H = W_heads.shape[0]
    outs = []
    mask = adj > 0
    for hd in range(H):
        W = W_heads[hd]
        a = a_heads[hd]
        wh = h @ W.T
        scores = (wh @ a[:D])[:, None] + (wh @ a[D:])[None, :]
        scores = jnp.where(scores >= 0, scores, 0.01 * scores)
        sm = jnp.where(mask, scores, -1e30)
        sm = sm - jnp.max(sm, axis=1, keepdims=True)
        e = jnp.where(mask, jnp.exp(sm), 0.0)
        alpha = e / jnp.maximum(e.sum(axis=1, keepdims=True), 1e-30)
        outs.append(jnp.maximum(alpha @ wh, 0.0))
    heads = jnp.concatenate(outs, axis=1)
    return heads @ w0.T


if __name__ == "__main__":
    N = 8          # number of nodes (len(h))
    D = 32         # input_dim (== out_dim per head)
    H = 4          # n_heads  (H * D = 128 -> lane-dense head packing)

    key = jax.random.PRNGKey(0)
    k_h, k_adj, k_w, k_a, k_w0 = jax.random.split(key, 5)

    h = jax.random.normal(k_h, (N, D), dtype=jnp.float32)

    # random 0/1 adjacency; guarantee at least one neighbor per node (self-loop)
    adj = (jax.random.uniform(k_adj, (N, N)) < 0.4).astype(jnp.float32)
    adj = jnp.maximum(adj, jnp.eye(N, dtype=jnp.float32))
    n_list = adj.sum(axis=1).astype(jnp.int32)   # accepted but unused by kernel

    # deterministic synthetic parameters (shapes from Multihead_GAT.__init__)
    W_heads = jax.random.normal(k_w, (H, D, D), dtype=jnp.float32) * 0.1   # fciandj per head
    a_heads = jax.random.normal(k_a, (H, 2 * D), dtype=jnp.float32) * 0.1  # key per head
    w0 = jax.random.normal(k_w0, (D, H * D), dtype=jnp.float32) * 0.1      # final linear

    # One-time parameter layout (kept out of the per-call hot path).
    W_ext, C_dstT, W0_all = prepare_gat_params(W_heads, a_heads, w0)

    out = multihead_gat(h, adj, n_list, W_ext, C_dstT, W0_all, n_heads=H)
    out = jax.block_until_ready(out)

    ref = multihead_gat_reference(h, adj, W_heads, a_heads, w0)
    assert out.shape == (N, D)
    # tolerance covers MXU-vs-XLA f32 matmul pass differences
    assert jnp.allclose(out, ref, atol=2e-3, rtol=2e-3), "mismatch vs reference"

    print("KERNEL_OK")
</pallas_src>

<mosaic_0001>
module attributes {stable_mosaic.version = 11 : i64} {
  func.func @mhgat_kernel(%arg0: memref<8x32xf32, #tpu.memory_space<vmem>>, %arg1: memref<8x8xf32, #tpu.memory_space<vmem>>, %arg2: memref<32x132xf32, #tpu.memory_space<vmem>>, %arg3: memref<4x32xf32, #tpu.memory_space<vmem>>, %arg4: memref<128x32xf32, #tpu.memory_space<vmem>>, %arg5: memref<8x32xf32, #tpu.memory_space<vmem>>) attributes {dimension_semantics = [], scalar_prefetch = 0 : i64, scratch_operands = 0 : i64, tpu.core_type = #tpu.core_type<tc>} {
    %c0 = arith.constant 0 : index
    %c0_0 = arith.constant 0 : index
    %0 = vector.load %arg0[%c0, %c0_0] : memref<8x32xf32, #tpu.memory_space<vmem>>, vector<8x32xf32>
    %c0_1 = arith.constant 0 : index
    %c0_2 = arith.constant 0 : index
    %1 = vector.load %arg1[%c0_1, %c0_2] : memref<8x8xf32, #tpu.memory_space<vmem>>, vector<8x8xf32>
    %c0_3 = arith.constant 0 : index
    %c0_4 = arith.constant 0 : index
    %2 = vector.load %arg2[%c0_3, %c0_4] : memref<32x132xf32, #tpu.memory_space<vmem>>, vector<32x132xf32>
    %cst = arith.constant dense<0.000000e+00> : vector<8x132xf32>
    %3 = tpu.matmul %0, %2, %cst {dimension_numbers = #tpu.dot_dimension_numbers<[1], [0], [0], [1], [0, 0, 1, 1], [], []>} : vector<8x32xf32>, vector<32x132xf32>, vector<8x132xf32> -> vector<8x132xf32>
    %4 = vector.extract_strided_slice %3 {offsets = [0, 0], sizes = [8, 128], strides = [1, 1]} : vector<8x132xf32> to vector<8x128xf32>
    %5 = vector.extract_strided_slice %3 {offsets = [0, 128], sizes = [8, 4], strides = [1, 1]} : vector<8x132xf32> to vector<8x4xf32>
    %c0_5 = arith.constant 0 : index
    %c0_6 = arith.constant 0 : index
    %6 = vector.load %arg3[%c0_5, %c0_6] : memref<4x32xf32, #tpu.memory_space<vmem>>, vector<4x32xf32>
    "tpu.trace_start"() <{level = 10 : i32, message = "hd,nd->hn"}> : () -> ()
    %cst_7 = arith.constant dense<0.000000e+00> : vector<4x8xf32>
    %7 = tpu.matmul %6, %0, %cst_7 {dimension_numbers = #tpu.dot_dimension_numbers<[1], [1], [0], [0], [0, 0, 1, 0], [], []>} : vector<4x32xf32>, vector<8x32xf32>, vector<4x8xf32> -> vector<4x8xf32>
    "tpu.trace_stop"() : () -> ()
    %8 = vector.extract_strided_slice %5 {offsets = [0, 0], sizes = [8, 1], strides = [1, 1]} : vector<8x4xf32> to vector<8x1xf32>
    %9 = vector.extract_strided_slice %7 {offsets = [0, 0], sizes = [1, 8], strides = [1, 1]} : vector<4x8xf32> to vector<1x8xf32>
    %10 = vector.broadcast %8 : vector<8x1xf32> to vector<8x8xf32>
    %11 = vector.broadcast %9 : vector<1x8xf32> to vector<8x8xf32>
    %12 = arith.addf %10, %11 : vector<8x8xf32>
    %13 = vector.extract_strided_slice %5 {offsets = [0, 1], sizes = [8, 1], strides = [1, 1]} : vector<8x4xf32> to vector<8x1xf32>
    %14 = vector.extract_strided_slice %7 {offsets = [1, 0], sizes = [1, 8], strides = [1, 1]} : vector<4x8xf32> to vector<1x8xf32>
    %15 = vector.broadcast %13 : vector<8x1xf32> to vector<8x8xf32>
    %16 = vector.broadcast %14 : vector<1x8xf32> to vector<8x8xf32>
    %17 = arith.addf %15, %16 : vector<8x8xf32>
    %18 = vector.extract_strided_slice %5 {offsets = [0, 2], sizes = [8, 1], strides = [1, 1]} : vector<8x4xf32> to vector<8x1xf32>
    %19 = vector.extract_strided_slice %7 {offsets = [2, 0], sizes = [1, 8], strides = [1, 1]} : vector<4x8xf32> to vector<1x8xf32>
    %20 = vector.broadcast %18 : vector<8x1xf32> to vector<8x8xf32>
    %21 = vector.broadcast %19 : vector<1x8xf32> to vector<8x8xf32>
    %22 = arith.addf %20, %21 : vector<8x8xf32>
    %23 = vector.extract_strided_slice %5 {offsets = [0, 3], sizes = [8, 1], strides = [1, 1]} : vector<8x4xf32> to vector<8x1xf32>
    %24 = vector.extract_strided_slice %7 {offsets = [3, 0], sizes = [1, 8], strides = [1, 1]} : vector<4x8xf32> to vector<1x8xf32>
    %25 = vector.broadcast %23 : vector<8x1xf32> to vector<8x8xf32>
    %26 = vector.broadcast %24 : vector<1x8xf32> to vector<8x8xf32>
    %27 = arith.addf %25, %26 : vector<8x8xf32>
    %28 = tpu.concatenate %12, %17, %22, %27 in 0 : vector<8x8xf32>, vector<8x8xf32>, vector<8x8xf32>, vector<8x8xf32> -> vector<32x8xf32>
    %cst_8 = arith.constant 0.000000e+00 : f32
    %29 = vector.broadcast %cst_8 : f32 to vector<32x8xf32>
    %30 = arith.cmpf oge, %28, %29 : vector<32x8xf32>
    %cst_9 = arith.constant 0.00999999977 : f32
    %31 = vector.broadcast %cst_9 : f32 to vector<32x8xf32>
    %32 = arith.mulf %31, %28 : vector<32x8xf32>
    %33 = arith.select %30, %28, %32 : vector<32x8xi1>, vector<32x8xf32>
    %34 = tpu.concatenate %1, %1, %1, %1 in 0 : vector<8x8xf32>, vector<8x8xf32>, vector<8x8xf32>, vector<8x8xf32> -> vector<32x8xf32>
    %cst_10 = arith.constant 0.000000e+00 : f32
    %35 = vector.broadcast %cst_10 : f32 to vector<32x8xf32>
    %36 = arith.cmpf ogt, %34, %35 : vector<32x8xf32>
    %cst_11 = arith.constant -1.000000e+30 : f32
    %37 = vector.broadcast %cst_11 : f32 to vector<32x8xf32>
    %38 = arith.select %36, %33, %37 : vector<32x8xi1>, vector<32x8xf32>
    %cst_12 = arith.constant dense<0xFF800000> : vector<32xf32>
    %39 = vector.multi_reduction <maximumf>, %38, %cst_12 [1] : vector<32x8xf32> to vector<32xf32>
    %40 = vector.shape_cast %39 : vector<32xf32> to vector<32x1xf32>
    %41 = vector.broadcast %40 : vector<32x1xf32> to vector<32x8xf32>
    %42 = arith.subf %38, %41 : vector<32x8xf32>
    %43 = math.exp %42 : vector<32x8xf32>
    %cst_13 = arith.constant dense<0.000000e+00> : vector<32xf32>
    %44 = vector.multi_reduction <add>, %43, %cst_13 [1] : vector<32x8xf32> to vector<32xf32>
    %45 = vector.shape_cast %44 : vector<32xf32> to vector<32x1xf32>
    %cst_14 = arith.constant 1.000000e-30 : f32
    %46 = vector.broadcast %cst_14 : f32 to vector<32x1xf32>
    %47 = arith.maximumf %45, %46 : vector<32x1xf32>
    %48 = vector.broadcast %47 : vector<32x1xf32> to vector<32x8xf32>
    %49 = arith.divf %43, %48 : vector<32x8xf32>
    %cst_15 = arith.constant dense<0.000000e+00> : vector<32x128xf32>
    %50 = tpu.matmul %49, %4, %cst_15 {dimension_numbers = #tpu.dot_dimension_numbers<[1], [0], [0], [1], [0, 0, 1, 1], [], []>} : vector<32x8xf32>, vector<8x128xf32>, vector<32x128xf32> -> vector<32x128xf32>
    %51 = vector.extract_strided_slice %50 {offsets = [0, 0], sizes = [8, 32], strides = [1, 1]} : vector<32x128xf32> to vector<8x32xf32>
    %52 = vector.extract_strided_slice %50 {offsets = [8, 32], sizes = [8, 32], strides = [1, 1]} : vector<32x128xf32> to vector<8x32xf32>
    %53 = vector.extract_strided_slice %50 {offsets = [16, 64], sizes = [8, 32], strides = [1, 1]} : vector<32x128xf32> to vector<8x32xf32>
    %54 = vector.extract_strided_slice %50 {offsets = [24, 96], sizes = [8, 32], strides = [1, 1]} : vector<32x128xf32> to vector<8x32xf32>
    %55 = tpu.concatenate %51, %52, %53, %54 in 1 : vector<8x32xf32>, vector<8x32xf32>, vector<8x32xf32>, vector<8x32xf32> -> vector<8x128xf32>
    %cst_16 = arith.constant 0.000000e+00 : f32
    %56 = vector.broadcast %cst_16 : f32 to vector<8x128xf32>
    %57 = arith.maximumf %55, %56 : vector<8x128xf32>
    %c0_17 = arith.constant 0 : index
    %c0_18 = arith.constant 0 : index
    %58 = vector.load %arg4[%c0_17, %c0_18] : memref<128x32xf32, #tpu.memory_space<vmem>>, vector<128x32xf32>
    %cst_19 = arith.constant dense<0.000000e+00> : vector<8x32xf32>
    %59 = tpu.matmul %57, %58, %cst_19 {dimension_numbers = #tpu.dot_dimension_numbers<[1], [0], [0], [1], [0, 0, 1, 1], [], []>} : vector<8x128xf32>, vector<128x32xf32>, vector<8x32xf32> -> vector<8x32xf32>
    %c0_20 = arith.constant 0 : index
    %c0_21 = arith.constant 0 : index
    %60 = vector.load %arg5[%c0_20, %c0_21] : memref<8x32xf32, #tpu.memory_space<vmem>>, vector<8x32xf32>
    tpu.vector_store %arg5[%c0_20, %c0_21], %59 {strides = array<i32>} : memref<8x32xf32, #tpu.memory_space<vmem>>, vector<8x32xf32>,
    return
  }
}

</mosaic_0001>

<llo_original>
// kernel: tpu_custom_call.1
$region0: #{tpu_custom_call.1}
  #allocation0 [shape = 'u32[]', space=smem, size = 0x4, offset = 0x4, fixed_abs, tag = 'smem constant byte address 0x4 - core index']
  #allocation1 [shape = 'u32[144,128]{1,0:T(1,128)}', space=vmem, size = 0x12000, scoped, tag = 'internal scratch']
  %s0 = inlined_call_operand.vmem [shape: f32[8,32], index: 0, kind: input, shape index: {}]
  %s1 = inlined_call_operand.vmem [shape: f32[8,8], index: 1, kind: input, shape index: {}]
  %s2 = inlined_call_operand.vmem [shape: f32[32,132], index: 2, kind: input, shape index: {}]
  %s3 = inlined_call_operand.vmem [shape: f32[4,32], index: 3, kind: input, shape index: {}]
  %s4 = inlined_call_operand.vmem [shape: f32[128,32], index: 4, kind: input, shape index: {}]
  %s5 = inlined_call_operand.hbm [shape: f32[8,32], index: 5, kind: output, shape index: {}]
  %s6 = sld [smem:[#allocation0]]
  $region30: #{tpu_custom_call.1} parent=0
    _
  %s8 = ssub.s32 1, %s6
  %s9 = scalar_select 0, %s8, %s6
  $region1: #{tpu_custom_call.1} parent=0
    #allocation2 [shape = 'u8[4096]{0}', space=vmem, size = 0x1000, scoped, tag = 'output window, operand 0, single buffered']
    #allocation3 [shape = 's32[1]{0}', space=sflag, size = 0x4, scoped, tag = 'scoped memory for tpu_custom_call.1']
    %10 = vsyncpa [#allocation3], 0
    // Predicated region
    $region2: #{tpu_custom_call.1} parent=1 // pred_check
      _
    $region3: #{tpu_custom_call.1} parent=1 // pred_check_branch
      %12 = sbr.rel (0) target = $region5
    $region4: #{tpu_custom_call.1} parent=1 // pred_region
      _
    $region5: #{tpu_custom_call.1} parent=1 // pred_fallthru
      _
    // Predicated region
    $region6: #{tpu_custom_call.1} parent=1 // pred_check
      _
    $region7: #{tpu_custom_call.1} parent=1 // pred_check_branch
      %14 = sbr.rel (0) target = $region9
    $region8: #{tpu_custom_call.1} parent=1 // pred_region
      _
    $region9: #{tpu_custom_call.1} parent=1 // pred_fallthru
      _
    // Predicated region
    $region10: #{tpu_custom_call.1} parent=1 // pred_check
      _
    $region11: #{tpu_custom_call.1} parent=1 // pred_check_branch
      %16 = sbr.rel (0) target = $region13
    $region12: #{tpu_custom_call.1} parent=1 // pred_region
      _
    $region13: #{tpu_custom_call.1} parent=1 // pred_fallthru
      _
    // Predicated region
    $region14: #{tpu_custom_call.1} parent=1 // pred_check
      _
    $region15: #{tpu_custom_call.1} parent=1 // pred_check_branch
      %18 = sbr.rel (0) target = $region17
    $region16: #{tpu_custom_call.1} parent=1 // pred_region
      _
    $region17: #{tpu_custom_call.1} parent=1 // pred_fallthru
      _
    // Predicated region
    $region18: #{tpu_custom_call.1} parent=1 // pred_check
      _
    $region19: #{tpu_custom_call.1} parent=1 // pred_check_branch
      %20 = sbr.rel (0) target = $region21
    $region20: #{tpu_custom_call.1} parent=1 // pred_region
      _
    $region21: #{tpu_custom_call.1} parent=1 // pred_fallthru
      _
    %v21 = vld [vmem:[%s0] sm:$0xff]
    %v22 = vld [vmem:[%s1] sm:$0xff]
    %v23 = vld [vmem:[%s2] sm:$0xff]
    %v24 = vld [vmem:[%s2 + $0x8] sm:$0xff]
    %v25 = vld [vmem:[%s2 + $0x10] sm:$0xff]
    %v26 = vld [vmem:[%s2 + $0x18] sm:$0xff]
    %v27 = vld [vmem:[%s2 + $0x20] sm:$0xff]
    %v28 = vld [vmem:[%s2 + $0x28] sm:$0xff]
    %v29 = vld [vmem:[%s2 + $0x30] sm:$0xff]
    %v30 = vld [vmem:[%s2 + $0x38] sm:$0xff]
    %vm31 = vcmask 261120
    %v33 = vsel %vm31, %v21, 0
    %35 = vmatprep.subr.mxu0 %v24
    %36 = vmatpush1.msra.mxu0 %v23
    %37 = vmatprep.subr.mxu0 %v26
    %38 = vmatpush1.msra.mxu0 %v25
    %39 = vmatprep.subr.mxu0 %v28
    %40 = vmatpush1.msra.mxu0 %v27
    %41 = vmatprep.subr.mxu0 %v30
    %42 = vmatpush1.msra.mxu0 %v29
    %43 = vmatprep.subr.mxu0 0.0
    %44 = vmatpush1.msra.mxu0 0.0
    %45 = vmatprep.subr.mxu0 0.0
    %46 = vmatpush1.msra.mxu0 0.0
    %47 = vmatprep.subr.mxu0 0.0
    %48 = vmatpush1.msra.mxu0 0.0
    %49 = vmatprep.subr.mxu0 0.0
    %50 = vmatpush1.msra.mxu0 0.0
    %51 = vmatprep.subr.mxu0 0.0
    %52 = vmatpush1.msra.mxu0 0.0
    %53 = vmatprep.subr.mxu0 0.0
    %54 = vmatpush1.msra.mxu0 0.0
    %55 = vmatprep.subr.mxu0 0.0
    %56 = vmatpush1.msra.mxu0 0.0
    %57 = vmatprep.subr.mxu0 0.0
    %58 = vmatpush1.msra.mxu0 0.0
    %59 = vmatprep.subr.mxu0 0.0
    %60 = vmatpush1.msra.mxu0 0.0
    %61 = vmatprep.subr.mxu0 0.0
    %62 = vmatpush1.msra.mxu0 0.0
    %63 = vmatprep.subr.mxu0 0.0
    %64 = vmatpush1.msra.mxu0 0.0
    %65 = vmatprep.subr.mxu0 0.0
    %66 = vmatpush1.msra.mxu0 0.0
    %67 = vmatprep.subr.mxu0 0.0
    %68 = vmatpush1.msra.mxu0 0.0
    %69 = vmatprep.subr.mxu0 0.0
    %70 = vmatpush1.msra.mxu0 0.0
    %71 = vmatprep.subr.mxu0 0.0
    %72 = vmatpush1.msra.mxu0 0.0
    %73 = vmatprep.subr.mxu0 0.0
    %74 = vmatpush1.msra.mxu0 0.0
    %75 = vmatprep.subr.mxu0 0.0
    %76 = vmatpush1.msra.mxu0 0.0
    %77 = vmatprep.subr.mxu0 0.0
    %78 = vmatpush1.msra.mxu0 0.0
    %79 = vmatprep.subr.mxu0 0.0
    %80 = vmatpush1.msra.mxu0 0.0
    %81 = vmatprep.subr.mxu0 0.0
    %82 = vmatpush1.msra.mxu0 0.0
    %83 = vmatprep.subr.mxu0 0.0
    %84 = vmatpush1.msra.mxu0 0.0
    %85 = vmatprep.subr.mxu0 0.0
    %86 = vmatpush1.msra.mxu0 0.0
    %87 = vmatprep.subr.mxu0 0.0
    %88 = vmatpush1.msra.mxu0 0.0
    %89 = vmatprep.subr.mxu0 0.0
    %90 = vmatpush1.msra.mxu0 0.0
    %91 = vmatprep.subr.mxu0 0.0
    %92 = vmatpush1.msra.mxu0 0.0
    %93 = vmatprep.subr.mxu0 0.0
    %94 = vmatpush1.msra.mxu0 0.0
    %95 = vmatprep.subr.mxu0 0.0
    %96 = vmatpush1.msra.mxu0 0.0
    %97 = vmatprep.subr.mxu0 0.0
    %98 = vmatpush1.msra.mxu0 0.0
    %99 = vmatprep.mubr.f32.mxu0 0.0
    %100 = vmatmul.mubr.f32.gmra.mrb[0].mxu0 %v33
    %v101 = vpop.f32.mrb[0].mxu0
    %v102 = vadd.f32 0.0, %v101
    %v103 = vpop.f32.mrb[0].mxu0
    %v104 = vadd.f32 0.0, %v103
    %105 = vdwg.mxu0
    %v106 = vld [vmem:[%s3] sm:$0xf]
    %v108 = vsel %vm31, %v106, 0
    %110 = vmatprep.subr.mxu0 0.0
    %111 = vmatpush1.xpose.msra.mxu0 %v33
    %112 = vmatprep.subr.mxu0 0.0
    %113 = vmatpush1.xpose.msra.mxu0 0.0
    %114 = vmatprep.subr.mxu0 0.0
    %115 = vmatpush1.xpose.msra.mxu0 0.0
    %116 = vmatprep.subr.mxu0 0.0
    %117 = vmatpush1.xpose.msra.mxu0 0.0
    %118 = vmatprep.subr.mxu0 0.0
    %119 = vmatpush1.xpose.msra.mxu0 0.0
    %120 = vmatprep.subr.mxu0 0.0
    %121 = vmatpush1.xpose.msra.mxu0 0.0
    %122 = vmatprep.subr.mxu0 0.0
    %123 = vmatpush1.xpose.msra.mxu0 0.0
    %124 = vmatprep.subr.mxu0 0.0
    %125 = vmatpush1.xpose.msra.mxu0 0.0
    %126 = vmatprep.subr.mxu0 0.0
    %127 = vmatpush1.xpose.msra.mxu0 0.0
    %128 = vmatprep.subr.mxu0 0.0
    %129 = vmatpush1.xpose.msra.mxu0 0.0
    %130 = vmatprep.subr.mxu0 0.0
    %131 = vmatpush1.xpose.msra.mxu0 0.0
    %132 = vmatprep.subr.mxu0 0.0
    %133 = vmatpush1.xpose.msra.mxu0 0.0
    %134 = vmatprep.subr.mxu0 0.0
    %135 = vmatpush1.xpose.msra.mxu0 0.0
    %136 = vmatprep.subr.mxu0 0.0
    %137 = vmatpush1.xpose.msra.mxu0 0.0
    %138 = vmatprep.subr.mxu0 0.0
    %139 = vmatpush1.xpose.msra.mxu0 0.0
    %140 = vmatprep.subr.mxu0 0.0
    %141 = vmatpush1.xpose.msra.mxu0 0.0
    %142 = vmatprep.subr.mxu0 0.0
    %143 = vmatpush1.xpose.msra.mxu0 0.0
    %144 = vmatprep.subr.mxu0 0.0
    %145 = vmatpush1.xpose.msra.mxu0 0.0
    %146 = vmatprep.subr.mxu0 0.0
    %147 = vmatpush1.xpose.msra.mxu0 0.0
    %148 = vmatprep.subr.mxu0 0.0
    %149 = vmatpush1.xpose.msra.mxu0 0.0
    %150 = vmatprep.subr.mxu0 0.0
    %151 = vmatpush1.xpose.msra.mxu0 0.0
    %152 = vmatprep.subr.mxu0 0.0
    %153 = vmatpush1.xpose.msra.mxu0 0.0
    %154 = vmatprep.subr.mxu0 0.0
    %155 = vmatpush1.xpose.msra.mxu0 0.0
    %156 = vmatprep.subr.mxu0 0.0
    %157 = vmatpush1.xpose.msra.mxu0 0.0
    %158 = vmatprep.subr.mxu0 0.0
    %159 = vmatpush1.xpose.msra.mxu0 0.0
    %160 = vmatprep.subr.mxu0 0.0
    %161 = vmatpush1.xpose.msra.mxu0 0.0
    %162 = vmatprep.subr.mxu0 0.0
    %163 = vmatpush1.xpose.msra.mxu0 0.0
    %164 = vmatprep.subr.mxu0 0.0
    %165 = vmatpush1.xpose.msra.mxu0 0.0
    %166 = vmatprep.subr.mxu0 0.0
    %167 = vmatpush1.xpose.msra.mxu0 0.0
    %168 = vmatprep.subr.mxu0 0.0
    %169 = vmatpush1.xpose.msra.mxu0 0.0
    %170 = vmatprep.subr.mxu0 0.0
    %171 = vmatpush1.xpose.msra.mxu0 0.0
    %172 = vmatprep.subr.mxu0 0.0
    %173 = vmatpush1.xpose.msra.mxu0 0.0
    %174 = vmatprep.mubr.f32.mxu0 0.0
    %175 = vmatmul.mubr.f32.gmra.mrb[0].mxu0 %v108
    %v176 = vpop.f32.mrb[0].mxu0
    %v177 = vadd.f32 0.0, %v176
    %v178 = vpop.f32.mrb[0].mxu0
    %179 = vdwg.mxu0
    %181 = vset.pattern.permute.xlu0 0
    %182 = vperm.xlu0 %181, %v104
    %v183 = vpop.permute.xlu0 %182
    %v185 = vlaneseq
    %v186 = vshrl.u32 %v185, 7
    %v187 = vsub.s32 0, %v186
    %v188 = vrot.slane %v177, %v187
    %v189 = vadd.f32 %v183, %v188
    %190 = vset.pattern.permute.xlu0 1
    %191 = vperm.xlu0 %190, %v104
    %v192 = vpop.permute.xlu0 %191
    %v194 = vlaneseq
    %v195 = vshrl.u32 %v194, 7
    %v196 = vsub.s32 1, %v195
    %v197 = vrot.slane %v177, %v196
    %v198 = vadd.f32 %v192, %v197
    %199 = vset.pattern.permute.xlu0 2
    %200 = vperm.xlu0 %199, %v104
    %v201 = vpop.permute.xlu0 %200
    %v203 = vlaneseq
    %v204 = vshrl.u32 %v203, 7
    %v205 = vsub.s32 2, %v204
    %v206 = vrot.slane %v177, %v205
    %v207 = vadd.f32 %v201, %v206
    %208 = vset.pattern.permute.xlu0 3
    %209 = vperm.xlu0 %208, %v104
    %v210 = vpop.permute.xlu0 %209
    %v212 = vlaneseq
    %v213 = vshrl.u32 %v212, 7
    %v214 = vsub.s32 3, %v213
    %v215 = vrot.slane %v177, %v214
    %v216 = vadd.f32 %v210, %v215
    %vm217 = vcmp.ge.f32.partialorder %v189, 0.0
    %vm218 = vcmp.ge.f32.partialorder %v198, 0.0
    %vm219 = vcmp.ge.f32.partialorder %v207, 0.0
    %vm220 = vcmp.ge.f32.partialorder %v216, 0.0
    %v221 = vmul.f32 %v189, 0.01
    %v222 = vmul.f32 %v198, 0.01
    %v223 = vmul.f32 %v207, 0.01
    %v224 = vmul.f32 %v216, 0.01
    %v225 = vsel %vm217, %v189, %v221
    %v226 = vsel %vm218, %v198, %v222
    %v227 = vsel %vm219, %v207, %v223
    %v228 = vsel %vm220, %v216, %v224
    %vm229 = vcmp.gt.f32.partialorder %v22, 0.0
    %v230 = vsel %vm229, %v225, -1e+30
    %v231 = vsel %vm229, %v226, -1e+30
    %v232 = vsel %vm229, %v227, -1e+30
    %v233 = vsel %vm229, %v228, -1e+30
    %vm234 = vcmask 64512
    %v235 = vsel %vm234, %v230, -inf
    %236 = vmax.xlane.f32.xlu0 %v235
    %v237 = vpop.xlane.xlu0 %236
    %v238 = vsel %vm234, %v231, -inf
    %239 = vmax.xlane.f32.xlu0 %v238
    %v240 = vpop.xlane.xlu0 %239
    %v241 = vsel %vm234, %v232, -inf
    %242 = vmax.xlane.f32.xlu0 %v241
    %v243 = vpop.xlane.xlu0 %242
    %v244 = vsel %vm234, %v233, -inf
    %245 = vmax.xlane.f32.xlu0 %v244
    %v246 = vpop.xlane.xlu0 %245
    %v247 = vsub.f32 %v230, %v237
    %v248 = vsub.f32 %v231, %v240
    %v249 = vsub.f32 %v232, %v243
    %v250 = vsub.f32 %v233, %v246
    %v251 = vmul.f32 %v247, 1.442695
    %v252 = vpow.pop %v251
    %v253 = vmul.f32 %v248, 1.442695
    %v254 = vpow.pop %v253
    %v255 = vmul.f32 %v249, 1.442695
    %v256 = vpow.pop %v255
    %v257 = vmul.f32 %v250, 1.442695
    %v258 = vpow.pop %v257
    %v259 = vsel %vm234, %v252, 0.0
    %260 = vadd.xlane.f32.xlu0 %v259
    %v261 = vpop.xlane.xlu0 %260
    %v262 = vsel %vm234, %v254, 0.0
    %263 = vadd.xlane.f32.xlu0 %v262
    %v264 = vpop.xlane.xlu0 %263
    %v265 = vsel %vm234, %v256, 0.0
    %266 = vadd.xlane.f32.xlu0 %v265
    %v267 = vpop.xlane.xlu0 %266
    %v268 = vsel %vm234, %v258, 0.0
    %269 = vadd.xlane.f32.xlu0 %v268
    %v270 = vpop.xlane.xlu0 %269
    %v271 = vmax.f32 %v261, 1e-30
    %v272 = vmax.f32 %v264, 1e-30
    %v273 = vmax.f32 %v267, 1e-30
    %v274 = vmax.f32 %v270, 1e-30
    %v275 = vrcp.pop %v271
    %v276 = vmul.f32 %v252, %v275
    %v277 = vrcp.pop %v272
    %v278 = vmul.f32 %v254, %v277
    %v279 = vrcp.pop %v273
    %v280 = vmul.f32 %v256, %v279
    %v281 = vrcp.pop %v274
    %v282 = vmul.f32 %v258, %v281
    %v284 = vsel %vm234, %v276, 0
    %v287 = vsel %vm234, %v278, 0
    %v290 = vsel %vm234, %v280, 0
    %v293 = vsel %vm234, %v282, 0
    %295 = vmatprep.subr.mxu0 0.0
    %296 = vmatpush1.msra.mxu0 %v102
    %297 = vmatprep.subr.mxu0 0.0
    %298 = vmatpush1.msra.mxu0 0.0
    %299 = vmatprep.subr.mxu0 0.0
    %300 = vmatpush1.msra.mxu0 0.0
    %301 = vmatprep.subr.mxu0 0.0
    %302 = vmatpush1.msra.mxu0 0.0
    %303 = vmatprep.subr.mxu0 0.0
    %304 = vmatpush1.msra.mxu0 0.0
    %305 = vmatprep.subr.mxu0 0.0
    %306 = vmatpush1.msra.mxu0 0.0
    %307 = vmatprep.subr.mxu0 0.0
    %308 = vmatpush1.msra.mxu0 0.0
    %309 = vmatprep.subr.mxu0 0.0
    %310 = vmatpush1.msra.mxu0 0.0
    %311 = vmatprep.subr.mxu0 0.0
    %312 = vmatpush1.msra.mxu0 0.0
    %313 = vmatprep.subr.mxu0 0.0
    %314 = vmatpush1.msra.mxu0 0.0
    %315 = vmatprep.subr.mxu0 0.0
    %316 = vmatpush1.msra.mxu0 0.0
    %317 = vmatprep.subr.mxu0 0.0
    %318 = vmatpush1.msra.mxu0 0.0
    %319 = vmatprep.subr.mxu0 0.0
    %320 = vmatpush1.msra.mxu0 0.0
    %321 = vmatprep.subr.mxu0 0.0
    %322 = vmatpush1.msra.mxu0 0.0
    %323 = vmatprep.subr.mxu0 0.0
    %324 = vmatpush1.msra.mxu0 0.0
    %325 = vmatprep.subr.mxu0 0.0
    %326 = vmatpush1.msra.mxu0 0.0
    %327 = vmatprep.subr.mxu0 0.0
    %328 = vmatpush1.msra.mxu0 0.0
    %329 = vmatprep.subr.mxu0 0.0
    %330 = vmatpush1.msra.mxu0 0.0
    %331 = vmatprep.subr.mxu0 0.0
    %332 = vmatpush1.msra.mxu0 0.0
    %333 = vmatprep.subr.mxu0 0.0
    %334 = vmatpush1.msra.mxu0 0.0
    %335 = vmatprep.subr.mxu0 0.0
    %336 = vmatpush1.msra.mxu0 0.0
    %337 = vmatprep.subr.mxu0 0.0
    %338 = vmatpush1.msra.mxu0 0.0
    %339 = vmatprep.subr.mxu0 0.0
    %340 = vmatpush1.msra.mxu0 0.0
    %341 = vmatprep.subr.mxu0 0.0
    %342 = vmatpush1.msra.mxu0 0.0
    %343 = vmatprep.subr.mxu0 0.0
    %344 = vmatpush1.msra.mxu0 0.0
    %345 = vmatprep.subr.mxu0 0.0
    %346 = vmatpush1.msra.mxu0 0.0
    %347 = vmatprep.subr.mxu0 0.0
    %348 = vmatpush1.msra.mxu0 0.0
    %349 = vmatprep.subr.mxu0 0.0
    %350 = vmatpush1.msra.mxu0 0.0
    %351 = vmatprep.subr.mxu0 0.0
    %352 = vmatpush1.msra.mxu0 0.0
    %353 = vmatprep.subr.mxu0 0.0
    %354 = vmatpush1.msra.mxu0 0.0
    %355 = vmatprep.subr.mxu0 0.0
    %356 = vmatpush1.msra.mxu0 0.0
    %357 = vmatprep.subr.mxu0 0.0
    %358 = vmatpush1.msra.mxu0 0.0
    %359 = vmatprep.mubr.f32.mxu0 0.0
    %360 = vmatmul.mubr.f32.gmra.mrb[0].mxu0 %v284
    %v361 = vpop.f32.mrb[0].mxu0
    %v362 = vadd.f32 0.0, %v361
    %v363 = vpop.f32.mrb[0].mxu0
    %364 = vmatprep.mubr.f32.mxu0 0.0
    %365 = vmatmul.mubr.f32.gmra.mrb[0].mxu0 %v287
    %v366 = vpop.f32.mrb[0].mxu0
    %v367 = vadd.f32 0.0, %v366
    %v368 = vpop.f32.mrb[0].mxu0
    %369 = vmatprep.mubr.f32.mxu0 0.0
    %370 = vmatmul.mubr.f32.gmra.mrb[0].mxu0 %v290
    %v371 = vpop.f32.mrb[0].mxu0
    %v372 = vadd.f32 0.0, %v371
    %v373 = vpop.f32.mrb[0].mxu0
    %374 = vmatprep.mubr.f32.mxu0 0.0
    %375 = vmatmul.mubr.f32.gmra.mrb[0].mxu0 %v293
    %v376 = vpop.f32.mrb[0].mxu0
    %v377 = vadd.f32 0.0, %v376
    %v378 = vpop.f32.mrb[0].mxu0
    %379 = vdwg.mxu0
    %v380 = vsel %vm31, %v362, %v367
    %vm381 = vcmask 523264
    %v382 = vsel %vm381, %v380, %v372
    %vm383 = vcmask 785408
    %v384 = vsel %vm383, %v382, %v377
    %v385 = vmax.f32 %v384, 0.0
    %v386 = vld [vmem:[%s4] sm:$0xff]
    %v387 = vld [vmem:[%s4 + $0x8] sm:$0xff]
    %v388 = vld [vmem:[%s4 + $0x10] sm:$0xff]
    %v389 = vld [vmem:[%s4 + $0x18] sm:$0xff]
    %v390 = vld [vmem:[%s4 + $0x20] sm:$0xff]
    %v391 = vld [vmem:[%s4 + $0x28] sm:$0xff]
    %v392 = vld [vmem:[%s4 + $0x30] sm:$0xff]
    %v393 = vld [vmem:[%s4 + $0x38] sm:$0xff]
    %v394 = vld [vmem:[%s4 + $0x40] sm:$0xff]
    %v395 = vld [vmem:[%s4 + $0x48] sm:$0xff]
    %v396 = vld [vmem:[%s4 + $0x50] sm:$0xff]
    %v397 = vld [vmem:[%s4 + $0x58] sm:$0xff]
    %v398 = vld [vmem:[%s4 + $0x60] sm:$0xff]
    %v399 = vld [vmem:[%s4 + $0x68] sm:$0xff]
    %v400 = vld [vmem:[%s4 + $0x70] sm:$0xff]
    %v401 = vld [vmem:[%s4 + $0x78] sm:$0xff]
    %402 = vmatprep.subr.mxu0 0.0
    %403 = vmatpush1.msra.mxu0 %v386
    %404 = vmatprep.subr.mxu0 0.0
    %405 = vmatpush1.msra.mxu0 %v387
    %406 = vmatprep.subr.mxu0 0.0
    %407 = vmatpush1.msra.mxu0 %v388
    %408 = vmatprep.subr.mxu0 0.0
    %409 = vmatpush1.msra.mxu0 %v389
    %410 = vmatprep.subr.mxu0 0.0
    %411 = vmatpush1.msra.mxu0 %v390
    %412 = vmatprep.subr.mxu0 0.0
    %413 = vmatpush1.msra.mxu0 %v391
    %414 = vmatprep.subr.mxu0 0.0
    %415 = vmatpush1.msra.mxu0 %v392
    %416 = vmatprep.subr.mxu0 0.0
    %417 = vmatpush1.msra.mxu0 %v393
    %418 = vmatprep.subr.mxu0 0.0
    %419 = vmatpush1.msra.mxu0 %v394
    %420 = vmatprep.subr.mxu0 0.0
    %421 = vmatpush1.msra.mxu0 %v395
    %422 = vmatprep.subr.mxu0 0.0
    %423 = vmatpush1.msra.mxu0 %v396
    %424 = vmatprep.subr.mxu0 0.0
    %425 = vmatpush1.msra.mxu0 %v397
    %426 = vmatprep.subr.mxu0 0.0
    %427 = vmatpush1.msra.mxu0 %v398
    %428 = vmatprep.subr.mxu0 0.0
    %429 = vmatpush1.msra.mxu0 %v399
    %430 = vmatprep.subr.mxu0 0.0
    %431 = vmatpush1.msra.mxu0 %v400
    %432 = vmatprep.subr.mxu0 0.0
    %433 = vmatpush1.msra.mxu0 %v401
    %434 = vmatprep.subr.mxu0 0.0
    %435 = vmatpush1.msra.mxu0 0.0
    %436 = vmatprep.subr.mxu0 0.0
    %437 = vmatpush1.msra.mxu0 0.0
    %438 = vmatprep.subr.mxu0 0.0
    %439 = vmatpush1.msra.mxu0 0.0
    %440 = vmatprep.subr.mxu0 0.0
    %441 = vmatpush1.msra.mxu0 0.0
    %442 = vmatprep.subr.mxu0 0.0
    %443 = vmatpush1.msra.mxu0 0.0
    %444 = vmatprep.subr.mxu0 0.0
    %445 = vmatpush1.msra.mxu0 0.0
    %446 = vmatprep.subr.mxu0 0.0
    %447 = vmatpush1.msra.mxu0 0.0
    %448 = vmatprep.subr.mxu0 0.0
    %449 = vmatpush1.msra.mxu0 0.0
    %450 = vmatprep.subr.mxu0 0.0
    %451 = vmatpush1.msra.mxu0 0.0
    %452 = vmatprep.subr.mxu0 0.0
    %453 = vmatpush1.msra.mxu0 0.0
    %454 = vmatprep.subr.mxu0 0.0
    %455 = vmatpush1.msra.mxu0 0.0
    %456 = vmatprep.subr.mxu0 0.0
    %457 = vmatpush1.msra.mxu0 0.0
    %458 = vmatprep.subr.mxu0 0.0
    %459 = vmatpush1.msra.mxu0 0.0
    %460 = vmatprep.subr.mxu0 0.0
    %461 = vmatpush1.msra.mxu0 0.0
    %462 = vmatprep.subr.mxu0 0.0
    %463 = vmatpush1.msra.mxu0 0.0
    %464 = vmatprep.subr.mxu0 0.0
    %465 = vmatpush1.msra.mxu0 0.0
    %466 = vmatprep.mubr.f32.mxu0 0.0
    %467 = vmatmul.mubr.f32.gmra.mrb[0].mxu0 %v385
    %v468 = vpop.f32.mrb[0].mxu0
    %v469 = vadd.f32 0.0, %v468
    %v470 = vpop.f32.mrb[0].mxu0
    %471 = vdwg.mxu0
    %472 = vst.msk [vmem:[#allocation2] sm:$0xff] %vm31, %v469
    // Predicated region
    $region22: #{tpu_custom_call.1} parent=1 // pred_check
      _
    $region23: #{tpu_custom_call.1} parent=1 // pred_check_branch
      %474 = sbr.rel (0) target = $region25
    $region24: #{tpu_custom_call.1} parent=1 // pred_region
      %s476 = ssub.s32 128, 128
      %477 = vsyncadd [#allocation3], %s476
      %s479 = sshll.u32 [#allocation2], 4
      %s480 = int_to_ptr.vmem [resolvable:$true] %s479
      %482 = dma.vmem_to_hbm [thread:$0]  %s480, 128, %s5, [#allocation3]
    $region25: #{tpu_custom_call.1} parent=1 // pred_fallthru
      _
    // Predicated region
    $region26: #{tpu_custom_call.1} parent=1 // pred_check
      _
    $region27: #{tpu_custom_call.1} parent=1 // pred_check_branch
      %484 = sbr.rel (0) target = $region29
    $region28: #{tpu_custom_call.1} parent=1 // pred_region
      %485 = dma.done [#allocation3], 128
    $region29: #{tpu_custom_call.1} parent=1 // pred_fallthru
      _
    %486 = vsyncpa [#allocation3], 1

</llo_original>
